<compile_context>
chip_gen: v7x
topology: tpu7x:2x2x1
jax: 0.10.0
libtpu: 0.0.40
codegen_flags: <defaults>
</compile_context>

<pallas_src>
import math

import numpy as np

import jax
import jax.numpy as jnp
from jax.experimental import pallas as pl
from jax.experimental.pallas import tpu as pltpu


# ------------------------------ helpers ------------------------------------ #
def _round_up(v, m):
    return ((v + m - 1) // m) * m


def _tpu_vmem_caps():
    """Return (physical VMEM per core, conservative double-buffer budget) in bytes."""
    try:
        cap = int(pltpu.get_tpu_info().vmem_capacity_bytes)
    except Exception:
        cap = 64 << 20          # v7x per-TC physical size; safe lower bound elsewhere
    # Leave half of VMEM for weights/bias blocks, compiler scratch and relayouts.
    budget = max(8 << 20, min(cap // 2, 64 << 20))
    return cap, budget


def _pick_time_tile(L, cin, d, in_bytes, out_bytes, budget, align):
    """Largest time-tile whose lane-padded, double-buffered tiles fit the budget."""
    lane = 128
    # Fixed-cost blocks (halo, weight, bias), double-buffered, lane/sublane padded.
    fixed = 2 * (8 * _round_up(cin, lane) * in_bytes
                 + 3 * _round_up(cin, 8) * _round_up(d, lane) * in_bytes
                 + 8 * _round_up(d, lane) * 4)
    # Per-time-row cost of the x tile + output tile (double buffered, lane padded).
    per_row = 2 * (_round_up(cin, lane) * in_bytes + _round_up(d, lane) * out_bytes)
    avail = max(0, budget - fixed)
    tl = int(avail // max(per_row, 1))
    tl = max(align, min(tl, 4096))      # >=512 rows keeps ~85% HBM roofline; 4096 is plenty
    tl = (tl // align) * align
    return L if tl >= L else tl         # full-extent time block is always legal


# ----------------------------- Pallas kernel ------------------------------- #
def circular_conv1d(x, weight, bias, *, compute_dtype=jnp.float32,
                    out_dtype=None, time_tile=None):
    """Circular Conv1d (kernel=3, padding=1) along time, taps built in VMEM.

    x:      (B, L, Cin)  NLC layout
    weight: (D, Cin, 3)  PyTorch Conv1d weight layout
    bias:   (D,)
    returns (B, L, D) in `out_dtype` (defaults to `compute_dtype`)
    """
    B, L, Cin = x.shape
    D = weight.shape[0]
    out_dtype = compute_dtype if out_dtype is None else out_dtype

    in_bytes = np.dtype(compute_dtype).itemsize
    out_bytes = np.dtype(out_dtype).itemsize
    align = 16 if min(in_bytes, out_bytes) < 4 else 8

    cap, budget = _tpu_vmem_caps()
    if time_tile is None:
        tl = _pick_time_tile(L, Cin, D, in_bytes, out_bytes, budget, align)
        if B == 1 and tl >= L and L >= 2 * align:
            # Keep >= 2 parallel grid steps so both megacore / v7x TCs get work.
            tl = max(align, _round_up(pl.cdiv(L, 2), align))
            if tl >= L:
                tl = L
    else:
        tl = min(int(time_tile), L)
    n_t = pl.cdiv(L, tl)

    # --- wrapper-side prep: NO duplicated x in HBM, only a tiny halo gather ---------
    x_c = x.astype(compute_dtype)                                   # (B, L, Cin)
    starts = jnp.arange(n_t, dtype=jnp.int32) * tl
    prev_idx = (starts - 1) % L                                     # row before tile start
    next_idx = jnp.minimum(starts + tl, L) % L                      # row after last VALID row
    halo_idx = jnp.stack([prev_idx, next_idx], axis=1)              # (n_t, 2)
    halo = jnp.take(x_c, halo_idx, axis=1)                          # (B, n_t, 2, Cin)  tiny

    # (D, Cin, 3) -> (3, Cin, D); tap k=0 <-> x[t-1], k=1 <-> x[t], k=2 <-> x[t+1].
    w_r = jnp.transpose(weight, (2, 1, 0)).astype(compute_dtype)    # (3, Cin, D)
    b2 = bias.reshape(1, D).astype(jnp.float32)

    def kernel(x_ref, halo_ref, w_ref, b_ref, o_ref):
        # x_ref: (1, TL, Cin); halo_ref: (1, 1, 2, Cin); w_ref: (3, Cin, D); b_ref: (1, D)
        x_t = x_ref[0]                                              # (TL, Cin)
        # Shift construction done in f32 (most robust layout path); cast back for the MXU.
        xf = x_t.astype(jnp.float32)
        hp = halo_ref[0, 0, 0:1, :].astype(jnp.float32)             # x[t0-1] (circular)
        hn = halo_ref[0, 0, 1:2, :].astype(jnp.float32)             # x[last_valid+1] (circular)
        # Number of valid rows in this (possibly ragged last) tile.
        valid = jnp.minimum(tl, L - pl.program_id(1) * tl)
        row = jax.lax.broadcasted_iota(jnp.int32, (tl, Cin), 0)
        # x[t-1]: sublane-rotate by +1, fix row 0 with the wrapped halo row.
        xp = jnp.where(row == 0, hp, pltpu.roll(xf, 1, 0)).astype(x_t.dtype)
        # x[t+1]: sublane-rotate by -1 (== tl-1), fix the last VALID row with the halo row.
        xn = jnp.where(row == valid - 1, hn, pltpu.roll(xf, tl - 1, 0)).astype(x_t.dtype)
        # Three K=Cin matmuls, f32 accumulation on the MXU.
        acc = jnp.dot(xp, w_ref[0], preferred_element_type=jnp.float32)
        acc = acc + jnp.dot(x_t, w_ref[1], preferred_element_type=jnp.float32)
        acc = acc + jnp.dot(xn, w_ref[2], preferred_element_type=jnp.float32)
        o_ref[0] = (acc + b_ref[...]).astype(o_ref.dtype)
        # Rows past `valid` are garbage but their output writes fall outside the array
        # bounds and are clipped by the pipelined writeback.

    # --- explicit VMEM accounting (lane/sublane padded, double buffered) ------------
    lane = 128
    footprint = 2 * (tl * _round_up(Cin, lane) * in_bytes           # x tile
                     + tl * _round_up(D, lane) * out_bytes          # out tile
                     + 8 * _round_up(Cin, lane) * in_bytes          # halo tile
                     + 3 * _round_up(Cin, 8) * _round_up(D, lane) * in_bytes  # weight
                     + 8 * _round_up(D, lane) * 4)                  # bias
    vmem_limit = int(min(cap, max(footprint + (8 << 20), 32 << 20)))

    cost = pl.CostEstimate(
        flops=2 * B * L * (3 * Cin) * D,
        transcendentals=0,
        bytes_accessed=(B * L * Cin + B * n_t * 2 * Cin + 3 * Cin * D) * in_bytes
                       + D * 4 + B * L * D * out_bytes)

    return pl.pallas_call(
        kernel,
        out_shape=jax.ShapeDtypeStruct((B, L, D), out_dtype),
        grid_spec=pltpu.PrefetchScalarGridSpec(
            num_scalar_prefetch=0,
            grid=(B, n_t),
            in_specs=[
                pl.BlockSpec((1, tl, Cin), lambda b, t: (b, t, 0)),
                pl.BlockSpec((1, 1, 2, Cin), lambda b, t: (b, t, 0, 0)),
                pl.BlockSpec((3, Cin, D), lambda b, t: (0, 0, 0)),
                pl.BlockSpec((1, D), lambda b, t: (0, 0)),
            ],
            out_specs=pl.BlockSpec((1, tl, D), lambda b, t: (b, t, 0)),
        ),
        compiler_params=pltpu.CompilerParams(
            dimension_semantics=("parallel", "parallel"),
            vmem_limit_bytes=vmem_limit,
        ),
        cost_estimate=cost,
    )(x_c, halo, w_r, b2)


# --------------------------- Module equivalent ----------------------------- #
class TokenEmbeddingPallas:
    """JAX/Pallas port of TokenEmbedding (is_split=False path)."""

    def __init__(self, c_in, d_model, tao=1, m=0, pad=True, is_split=False,
                 key=None, compute_dtype=jnp.float32, out_dtype=jnp.float32):
        assert not is_split  # TODO(synk): is_split=True per-channel conv path not implemented
        self.c_in = c_in
        self.d_model = d_model
        self.tao = tao
        self.m = m
        self.pad = pad
        self.compute_dtype = compute_dtype
        self.out_dtype = out_dtype

        key = jax.random.PRNGKey(0) if key is None else key
        kw, kb = jax.random.split(key)
        in_ch = c_in * (m + 1)
        ksize = 3
        fan_in = in_ch * ksize
        # kaiming_normal_(mode='fan_in', nonlinearity='leaky_relu')
        gain = math.sqrt(2.0 / (1.0 + 0.01 ** 2))
        std = gain / math.sqrt(fan_in)
        self.weight = std * jax.random.normal(kw, (d_model, in_ch, ksize), dtype=jnp.float32)
        # PyTorch Conv1d default bias init: U(-1/sqrt(fan_in), 1/sqrt(fan_in))
        bound = 1.0 / math.sqrt(fan_in)
        self.bias = jax.random.uniform(kb, (d_model,), dtype=jnp.float32,
                                       minval=-bound, maxval=bound)

    def _data_extract(self, x):
        """Vectorized faithful-vector extraction. x: (B, L, C) -> (B, L - m*tao, C*(m+1))."""
        B, L, C = x.shape
        m, tao = self.m, self.tao
        n_valid = L - m * tao
        if n_valid <= 0:
            raise ValueError("Invalid n_valid; check seq_length, m, tao.")
        t_idx = jnp.arange(m * tao, L)                           # (n_valid,)
        offsets = jnp.arange(0, m + 1) * tao                     # (m+1,)
        time_idx = t_idx[:, None] - offsets[None, :]             # (n_valid, m+1)
        ext = x[:, time_idx, :]                                  # (B, n_valid, m+1, C)
        ext = jnp.transpose(ext, (0, 1, 3, 2))                   # (B, n_valid, C, m+1)
        return ext.reshape(B, n_valid, C * (m + 1))

    def __call__(self, x):
        # x: (B, L, c_in)
        x = x.astype(jnp.float32)
        x_emb = self._data_extract(x)                            # (B, L - m*tao, C*(m+1))
        if self.pad:
            x_emb = jnp.pad(x_emb, ((0, 0), (self.m * self.tao, 0), (0, 0)))
        return circular_conv1d(x_emb, self.weight, self.bias,
                               compute_dtype=self.compute_dtype,
                               out_dtype=self.out_dtype)         # (B, L, d_model)


# ------------------------------ Reference ---------------------------------- #
def _ref_circular_conv1d(x, weight, bias):
    xp = jnp.roll(x, 1, axis=1)
    xn = jnp.roll(x, -1, axis=1)
    out = (jnp.einsum("blc,dc->bld", xp, weight[:, :, 0])
           + jnp.einsum("blc,dc->bld", x, weight[:, :, 1])
           + jnp.einsum("blc,dc->bld", xn, weight[:, :, 2]))
    return out + bias[None, None, :]


if __name__ == "__main__":
    B, L, C_IN, D_MODEL = 2, 8, 4, 32

    key = jax.random.PRNGKey(0)
    kx, kp, kx2 = jax.random.split(key, 3)
    x = jax.random.normal(kx, (B, L, C_IN), dtype=jnp.float32)

    # f32 path (matches the PyTorch f32 conv up to MXU matmul-pass precision).
    emb = TokenEmbeddingPallas(c_in=C_IN, d_model=D_MODEL, tao=1, m=0,
                               pad=True, is_split=False, key=kp)
    out = jax.block_until_ready(emb(x))
    assert out.shape == (B, L, D_MODEL), out.shape
    ref = _ref_circular_conv1d(x, emb.weight, emb.bias)
    assert jnp.allclose(out, ref, atol=2e-2, rtol=2e-2), \
        float(jnp.max(jnp.abs(out - ref)))

    # Multi-tile path: exercises cross-tile circular wrap + ragged last tile + halo fix-up.
    L2 = 24
    x2 = jax.random.normal(kx2, (B, L2, C_IN), dtype=jnp.float32)
    out2 = jax.block_until_ready(
        circular_conv1d(x2, emb.weight, emb.bias, time_tile=16))
    ref2 = _ref_circular_conv1d(x2, emb.weight, emb.bias)
    assert out2.shape == (B, L2, D_MODEL), out2.shape
    assert jnp.allclose(out2, ref2, atol=2e-2, rtol=2e-2), \
        float(jnp.max(jnp.abs(out2 - ref2)))

    # bf16 compute + bf16 output (halves HBM traffic on this memory-bound kernel).
    emb_bf16 = TokenEmbeddingPallas(c_in=C_IN, d_model=D_MODEL, tao=1, m=0,
                                    pad=True, is_split=False, key=kp,
                                    compute_dtype=jnp.bfloat16, out_dtype=jnp.bfloat16)
    out_bf16 = jax.block_until_ready(emb_bf16(x))
    assert out_bf16.shape == (B, L, D_MODEL), out_bf16.shape
    assert jnp.allclose(out_bf16.astype(jnp.float32), ref, atol=1e-1, rtol=1e-1), \
        float(jnp.max(jnp.abs(out_bf16.astype(jnp.float32) - ref)))

    print("KERNEL_OK")
</pallas_src>

<mosaic_0001>
module attributes {stable_mosaic.version = 11 : i64} {
  func.func @kernel(%arg0: i32, %arg1: i32, %arg2: memref<1x8x4xf32, #tpu.memory_space<vmem>>, %arg3: memref<1x1x2x4xf32, #tpu.memory_space<vmem>>, %arg4: memref<3x4x32xf32, #tpu.memory_space<vmem>>, %arg5: memref<1x32xf32, #tpu.memory_space<vmem>>, %arg6: memref<1x8x32xf32, #tpu.memory_space<vmem>>) attributes {dimension_semantics = [#tpu.dimension_semantics<parallel>, #tpu.dimension_semantics<parallel>], iteration_bounds = array<i64: 2, 1>, scalar_prefetch = 0 : i64, scratch_operands = 0 : i64, tpu.core_type = #tpu.core_type<tc>, window_params = [{transform_indices = @transform_0, window_bounds = array<i64: 1, 8, 4>}, {transform_indices = @transform_1, window_bounds = array<i64: 1, 1, 2, 4>}, {pipeline_mode = #tpu.pipeline_mode<synchronous>, transform_indices = @transform_2, window_bounds = array<i64: 3, 4, 32>}, {pipeline_mode = #tpu.pipeline_mode<synchronous>, transform_indices = @transform_3, window_bounds = array<i64: 1, 32>}, {transform_indices = @transform_4, window_bounds = array<i64: 1, 8, 32>}]} {
    %c0 = arith.constant 0 : index
    %c0_0 = arith.constant 0 : index
    %c0_1 = arith.constant 0 : index
    %0 = vector.load %arg2[%c0, %c0_0, %c0_1] : memref<1x8x4xf32, #tpu.memory_space<vmem>>, vector<1x8x4xf32>
    %1 = vector.shape_cast %0 : vector<1x8x4xf32> to vector<8x4xf32>
    %c0_2 = arith.constant 0 : index
    %c0_3 = arith.constant 0 : index
    %c0_4 = arith.constant 0 : index
    %c0_5 = arith.constant 0 : index
    %2 = vector.load %arg3[%c0_2, %c0_3, %c0_4, %c0_5] : memref<1x1x2x4xf32, #tpu.memory_space<vmem>>, vector<1x1x1x4xf32>
    %3 = vector.shape_cast %2 : vector<1x1x1x4xf32> to vector<1x4xf32>
    %c0_6 = arith.constant 0 : index
    %c0_7 = arith.constant 0 : index
    %c1 = arith.constant 1 : index
    %c0_8 = arith.constant 0 : index
    %4 = vector.load %arg3[%c0_6, %c0_7, %c1, %c0_8] : memref<1x1x2x4xf32, #tpu.memory_space<vmem>>, vector<1x1x1x4xf32>
    %5 = vector.shape_cast %4 : vector<1x1x1x4xf32> to vector<1x4xf32>
    %c8_i32 = arith.constant 8 : i32
    %6 = arith.muli %arg1, %c8_i32 : i32
    %c8_i32_9 = arith.constant 8 : i32
    %7 = arith.subi %c8_i32_9, %6 : i32
    %c8_i32_10 = arith.constant 8 : i32
    %8 = arith.minsi %c8_i32_10, %7 : i32
    %9 = tpu.iota {dimensions = array<i32: 0>} : vector<8x4xi32>
    %c0_i32 = arith.constant 0 : i32
    %10 = vector.broadcast %c0_i32 : i32 to vector<8x4xi32>
    %11 = arith.cmpi eq, %9, %10 : vector<8x4xi32>
    %c1_i32 = arith.constant 1 : i32
    %12 = tpu.dynamic_rotate %1 by %c1_i32 dim 0 : vector<8x4xf32>, i32 -> vector<8x4xf32>
    %13 = vector.shape_cast %3 : vector<1x4xf32> to vector<1x4xf32>
    %14 = vector.broadcast %13 : vector<1x4xf32> to vector<8x4xf32>
    %15 = arith.select %11, %14, %12 : vector<8x4xi1>, vector<8x4xf32>
    %c1_i32_11 = arith.constant 1 : i32
    %16 = arith.subi %8, %c1_i32_11 : i32
    %17 = vector.broadcast %16 : i32 to vector<8x4xi32>
    %18 = arith.cmpi eq, %9, %17 : vector<8x4xi32>
    %c7_i32 = arith.constant 7 : i32
    %19 = tpu.dynamic_rotate %1 by %c7_i32 dim 0 : vector<8x4xf32>, i32 -> vector<8x4xf32>
    %20 = vector.shape_cast %5 : vector<1x4xf32> to vector<1x4xf32>
    %21 = vector.broadcast %20 : vector<1x4xf32> to vector<8x4xf32>
    %22 = arith.select %18, %21, %19 : vector<8x4xi1>, vector<8x4xf32>
    %c0_12 = arith.constant 0 : index
    %c0_13 = arith.constant 0 : index
    %c0_14 = arith.constant 0 : index
    %23 = vector.load %arg4[%c0_12, %c0_13, %c0_14] : memref<3x4x32xf32, #tpu.memory_space<vmem>>, vector<1x4x32xf32>
    %24 = vector.shape_cast %23 : vector<1x4x32xf32> to vector<4x32xf32>
    %cst = arith.constant dense<0.000000e+00> : vector<8x32xf32>
    %25 = tpu.matmul %15, %24, %cst {dimension_numbers = #tpu.dot_dimension_numbers<[1], [0], [0], [1], [0, 0, 1, 1], [], []>} : vector<8x4xf32>, vector<4x32xf32>, vector<8x32xf32> -> vector<8x32xf32>
    %c1_15 = arith.constant 1 : index
    %c0_16 = arith.constant 0 : index
    %c0_17 = arith.constant 0 : index
    %26 = vector.load %arg4[%c1_15, %c0_16, %c0_17] : memref<3x4x32xf32, #tpu.memory_space<vmem>>, vector<1x4x32xf32>
    %27 = vector.shape_cast %26 : vector<1x4x32xf32> to vector<4x32xf32>
    %cst_18 = arith.constant dense<0.000000e+00> : vector<8x32xf32>
    %28 = tpu.matmul %1, %27, %cst_18 {dimension_numbers = #tpu.dot_dimension_numbers<[1], [0], [0], [1], [0, 0, 1, 1], [], []>} : vector<8x4xf32>, vector<4x32xf32>, vector<8x32xf32> -> vector<8x32xf32>
    %29 = arith.addf %25, %28 : vector<8x32xf32>
    %c2 = arith.constant 2 : index
    %c0_19 = arith.constant 0 : index
    %c0_20 = arith.constant 0 : index
    %30 = vector.load %arg4[%c2, %c0_19, %c0_20] : memref<3x4x32xf32, #tpu.memory_space<vmem>>, vector<1x4x32xf32>
    %31 = vector.shape_cast %30 : vector<1x4x32xf32> to vector<4x32xf32>
    %cst_21 = arith.constant dense<0.000000e+00> : vector<8x32xf32>
    %32 = tpu.matmul %22, %31, %cst_21 {dimension_numbers = #tpu.dot_dimension_numbers<[1], [0], [0], [1], [0, 0, 1, 1], [], []>} : vector<8x4xf32>, vector<4x32xf32>, vector<8x32xf32> -> vector<8x32xf32>
    %33 = arith.addf %29, %32 : vector<8x32xf32>
    %c0_22 = arith.constant 0 : index
    %c0_23 = arith.constant 0 : index
    %34 = vector.load %arg5[%c0_22, %c0_23] : memref<1x32xf32, #tpu.memory_space<vmem>>, vector<1x32xf32>
    %35 = vector.broadcast %34 : vector<1x32xf32> to vector<8x32xf32>
    %36 = arith.addf %33, %35 : vector<8x32xf32>
    %c0_24 = arith.constant 0 : index
    %c0_25 = arith.constant 0 : index
    %c0_26 = arith.constant 0 : index
    %37 = vector.load %arg6[%c0_24, %c0_25, %c0_26] : memref<1x8x32xf32, #tpu.memory_space<vmem>>, vector<1x8x32xf32>
    %38 = vector.shape_cast %37 : vector<1x8x32xf32> to vector<8x32xf32>
    %39 = vector.shape_cast %36 : vector<8x32xf32> to vector<1x8x32xf32>
    tpu.vector_store %arg6[%c0_24, %c0_25, %c0_26], %39 {strides = array<i32>} : memref<1x8x32xf32, #tpu.memory_space<vmem>>, vector<1x8x32xf32>,
    return
  }
  func.func @transform_0(%arg0: i32, %arg1: i32) -> (i32, i32, i32) {
    %c0_i32 = arith.constant 0 : i32
    %c0_i32_0 = arith.constant 0 : i32
    return %arg0, %arg1, %c0_i32 : i32, i32, i32
  }
  func.func @transform_1(%arg0: i32, %arg1: i32) -> (i32, i32, i32, i32) {
    %c0_i32 = arith.constant 0 : i32
    %c0_i32_0 = arith.constant 0 : i32
    %c0_i32_1 = arith.constant 0 : i32
    return %arg0, %arg1, %c0_i32, %c0_i32_0 : i32, i32, i32, i32
  }
  func.func @transform_2(%arg0: i32, %arg1: i32) -> (i32, i32, i32) {
    %c0_i32 = arith.constant 0 : i32
    %c0_i32_0 = arith.constant 0 : i32
    %c0_i32_1 = arith.constant 0 : i32
    %c0_i32_2 = arith.constant 0 : i32
    return %c0_i32, %c0_i32_0, %c0_i32_1 : i32, i32, i32
  }
  func.func @transform_3(%arg0: i32, %arg1: i32) -> (i32, i32) {
    %c0_i32 = arith.constant 0 : i32
    %c0_i32_0 = arith.constant 0 : i32
    %c0_i32_1 = arith.constant 0 : i32
    return %c0_i32, %c0_i32_0 : i32, i32
  }
  func.func @transform_4(%arg0: i32, %arg1: i32) -> (i32, i32, i32) {
    %c0_i32 = arith.constant 0 : i32
    %c0_i32_0 = arith.constant 0 : i32
    return %arg0, %arg1, %c0_i32 : i32, i32, i32
  }
}

</mosaic_0001>

<llo_original>
// kernel: tpu_custom_call.1
$region0: #{tpu_custom_call.1}
  #allocation0 [shape = 'u32[]', space=smem, size = 0x4, offset = 0x4, fixed_abs, tag = 'smem constant byte address 0x4 - core index']
  #allocation1 [shape = 'u32[144,128]{1,0:T(1,128)}', space=vmem, size = 0x12000, scoped, tag = 'internal scratch']
  %s0 = inlined_call_operand.vmem [shape: f32[2,8,4], index: 0, kind: input, shape index: {}]
  %s1 = inlined_call_operand.vmem [shape: f32[2,1,2,4], index: 1, kind: input, shape index: {}]
  %s2 = inlined_call_operand.vmem [shape: f32[3,4,32], index: 2, kind: input, shape index: {}]
  %s3 = inlined_call_operand.vmem [shape: f32[1,32], index: 3, kind: input, shape index: {}]
  %s4 = inlined_call_operand.hbm [shape: f32[2,8,32], index: 4, kind: output, shape index: {}]
  %s5 = sld [smem:[#allocation0]]
  $region49: #{tpu_custom_call.1} parent=0
    _
  %s7 = ssub.s32 1, %s5
  %s8 = scalar_select 0, %s7, %s5
  $region1: #{tpu_custom_call.1} parent=0
    #allocation2 [shape = 'u8[8192]{0}', space=vmem, size = 0x2000, scoped, tag = 'output window, operand 0']
    #allocation3 [shape = 's32[2]{0}', space=sflag, size = 0x8, scoped, tag = 'scoped memory for tpu_custom_call.1']
    %9 = vsyncpa [#allocation3], 0
    %s10 = scalar_lea.sflag [#allocation3], 1
    %11 = vsyncpa %s10, 0
    loop: start=0, step=1, limit=4
    $region2: #{tpu_custom_call.1} parent=1 // loop_pre_header
      _
    $region3: #{tpu_custom_call.1} parent=1 // loop_header
      %s13 = sphi 0, %s17
      %p14 = scmp.ge.s32.totalorder %s13, 4
      %s20 = sphi 0, %s32
      %s21 = sphi 0, %s28
      %s22 = sphi 0, %s20
      %s23 = sphi 0, %s21
      %s24 = sphi 0, %s22
      %s25 = sphi 0, %s23
      %s37 = sphi 0, %s39
      %s40 = sphi 0, %s37
      %s41 = sphi 0, %s40
      %s57 = sphi 0, %s41
      %s65 = sphi 0, %s67
      %s68 = sphi 0, %s65
      %s69 = sphi 0, %s68
      %s85 = sphi 0, %s69
      %s89 = sphi 0, %s89
      %s91 = sphi 0, %s89
      %s92 = sphi 0, %s91
      %s106 = sphi 0, %s92
      %s110 = sphi 0, %s110
      %s112 = sphi 0, %s110
      %s113 = sphi 0, %s112
      %s127 = sphi 0, %s113
      %s135 = sphi 0, %s137
      %s138 = sphi 0, %s135
      %s139 = sphi 0, %s138
      %s155 = sphi 0, %s139
    $region4: #{tpu_custom_call.1} parent=1 // loop_header_branch
      %16 = sbr.rel (%p14) target = $region8
    $region5: #{tpu_custom_call.1} parent=1 // loop_body
      %s18 = ssub.s32 %s13, 1
      %s19 = ssub.s32 %s13, 2
      %s26 = sadd.s32 1, %s21
      %p27 = scmp.ge.s32.totalorder %s26, 1
      %s28 = scalar_select %p27, 0, %s26
      %s29 = sadd.s32 1, %s20
      %s30 = scalar_select %p27, %s29, %s20
      %p31 = scmp.ge.s32.totalorder %s30, 2
      %s32 = scalar_select %p31, 0, %s30
      %s33 = ssub.s32 %s20, %s32
      %s34 = ssub.s32 %s21, %s28
      %s35 = sor.u32 %s33, %s34
      %p36 = scmp.eq.s32.totalorder %s35, 0
      %s38 = sadd.s32 %s37, 1
      %s39 = scalar_select %p36, %s37, %s38
      %p42 = pneg %p36
      %p43 = scmp.eq.s32.totalorder %s13, 1
      %p44 = por %p42, %p43
      %p45 = scmp.ne.s32.totalorder %s37, %s40
      %p46 = scmp.eq.s32.totalorder %s13, 0
      %p47 = por %p45, %p46
      %p48 = scmp.ne.s32.totalorder %s37, %s40
      %p49 = scmp.eq.s32.totalorder %s18, 1
      %p50 = por %p48, %p49
      %p51 = scmp.ne.s32.totalorder %s40, %s41
      %p52 = scmp.eq.s32.totalorder %s18, 0
      %p53 = por %p51, %p52
      %p54 = scmp.ne.s32.totalorder %s40, %s41
      %p55 = scmp.eq.s32.totalorder %s19, 1
      %p56 = por %p54, %p55
      %p58 = scmp.ne.s32.totalorder %s41, %s57
      %p59 = scmp.eq.s32.totalorder %s19, 0
      %p60 = por %p58, %p59
      %s61 = ssub.s32 %s20, %s32
      %s62 = ssub.s32 %s21, %s28
      %s63 = sor.u32 %s61, %s62
      %p64 = scmp.eq.s32.totalorder %s63, 0
      %s66 = sadd.s32 %s65, 1
      %s67 = scalar_select %p64, %s65, %s66
      %p70 = pneg %p64
      %p71 = scmp.eq.s32.totalorder %s13, 1
      %p72 = por %p70, %p71
      %p73 = scmp.ne.s32.totalorder %s65, %s68
      %p74 = scmp.eq.s32.totalorder %s13, 0
      %p75 = por %p73, %p74
      %p76 = scmp.ne.s32.totalorder %s65, %s68
      %p77 = scmp.eq.s32.totalorder %s18, 1
      %p78 = por %p76, %p77
      %p79 = scmp.ne.s32.totalorder %s68, %s69
      %p80 = scmp.eq.s32.totalorder %s18, 0
      %p81 = por %p79, %p80
      %p82 = scmp.ne.s32.totalorder %s68, %s69
      %p83 = scmp.eq.s32.totalorder %s19, 1
      %p84 = por %p82, %p83
      %p86 = scmp.ne.s32.totalorder %s69, %s85
      %p87 = scmp.eq.s32.totalorder %s19, 0
      %p88 = por %p86, %p87
      %s90 = sadd.s32 %s89, 1
      %p93 = scmp.eq.s32.totalorder %s13, 1
      %p94 = scmp.ne.s32.totalorder %s89, %s91
      %p95 = scmp.eq.s32.totalorder %s13, 0
      %p96 = por %p94, %p95
      %p97 = scmp.ne.s32.totalorder %s89, %s91
      %p98 = scmp.eq.s32.totalorder %s18, 1
      %p99 = por %p97, %p98
      %p100 = scmp.ne.s32.totalorder %s91, %s92
      %p101 = scmp.eq.s32.totalorder %s18, 0
      %p102 = por %p100, %p101
      %p103 = scmp.ne.s32.totalorder %s91, %s92
      %p104 = scmp.eq.s32.totalorder %s19, 1
      %p105 = por %p103, %p104
      %p107 = scmp.ne.s32.totalorder %s92, %s106
      %p108 = scmp.eq.s32.totalorder %s19, 0
      %p109 = por %p107, %p108
      %s111 = sadd.s32 %s110, 1
      %p114 = scmp.eq.s32.totalorder %s13, 1
      %p115 = scmp.ne.s32.totalorder %s110, %s112
      %p116 = scmp.eq.s32.totalorder %s13, 0
      %p117 = por %p115, %p116
      %p118 = scmp.ne.s32.totalorder %s110, %s112
      %p119 = scmp.eq.s32.totalorder %s18, 1
      %p120 = por %p118, %p119
      %p121 = scmp.ne.s32.totalorder %s112, %s113
      %p122 = scmp.eq.s32.totalorder %s18, 0
      %p123 = por %p121, %p122
      %p124 = scmp.ne.s32.totalorder %s112, %s113
      %p125 = scmp.eq.s32.totalorder %s19, 1
      %p126 = por %p124, %p125
      %p128 = scmp.ne.s32.totalorder %s113, %s127
      %p129 = scmp.eq.s32.totalorder %s19, 0
      %p130 = por %p128, %p129
      %s131 = ssub.s32 %s20, %s32
      %s132 = ssub.s32 %s21, %s28
      %s133 = sor.u32 %s131, %s132
      %p134 = scmp.eq.s32.totalorder %s133, 0
      %s136 = sadd.s32 %s135, 1
      %s137 = scalar_select %p134, %s135, %s136
      %p140 = pneg %p134
      %p141 = scmp.eq.s32.totalorder %s13, 1
      %p142 = por %p140, %p141
      %p143 = scmp.ne.s32.totalorder %s135, %s138
      %p144 = scmp.eq.s32.totalorder %s13, 0
      %p145 = por %p143, %p144
      %p146 = scmp.ne.s32.totalorder %s135, %s138
      %p147 = scmp.eq.s32.totalorder %s18, 1
      %p148 = por %p146, %p147
      %p149 = scmp.ne.s32.totalorder %s138, %s139
      %p150 = scmp.eq.s32.totalorder %s18, 0
      %p151 = por %p149, %p150
      %p152 = scmp.ne.s32.totalorder %s138, %s139
      %p153 = scmp.eq.s32.totalorder %s19, 1
      %p154 = por %p152, %p153
      %p156 = scmp.ne.s32.totalorder %s139, %s155
      %p157 = scmp.eq.s32.totalorder %s19, 0
      %p158 = por %p156, %p157
      %p159 = scmp.le.s32.totalorder 1, %s13
      %p160 = scmp.lt.s32.totalorder %s13, 3
      %p161 = pnand %p159, %p160
      %p162 = pneg %p161
      // Predicated region
      $region9: #{tpu_custom_call.1} parent=5 // pred_check
        _
      $region10: #{tpu_custom_call.1} parent=5 // pred_check_branch
        %164 = sbr.rel (%p161) target = $region12
      $region11: #{tpu_custom_call.1} parent=5 // pred_region
        %s165 = ssub.s32 %s13, 1
        // Predicated region
        $region13: #{tpu_custom_call.1} parent=11 // pred_check
          %p166 = pneg %p102
        $region14: #{tpu_custom_call.1} parent=11 // pred_check_branch
          %168 = sbr.rel (%p166) target = $region16
        $region15: #{tpu_custom_call.1} parent=11 // pred_region
          _
        $region16: #{tpu_custom_call.1} parent=11 // pred_fallthru
          _
        // Predicated region
        $region17: #{tpu_custom_call.1} parent=11 // pred_check
          %p169 = pneg %p123
        $region18: #{tpu_custom_call.1} parent=11 // pred_check_branch
          %171 = sbr.rel (%p169) target = $region20
        $region19: #{tpu_custom_call.1} parent=11 // pred_region
          _
        $region20: #{tpu_custom_call.1} parent=11 // pred_fallthru
          _
      $region12: #{tpu_custom_call.1} parent=5 // pred_fallthru
        _
      %p172 = scmp.lt.s32.totalorder %s13, 2
      // Predicated region
      $region21: #{tpu_custom_call.1} parent=5 // pred_check
        %p173 = pneg %p172
      $region22: #{tpu_custom_call.1} parent=5 // pred_check_branch
        %175 = sbr.rel (%p173) target = $region24
      $region23: #{tpu_custom_call.1} parent=5 // pred_region
        // Predicated region
        $region25: #{tpu_custom_call.1} parent=23 // pred_check
          %p176 = pneg %p47
        $region26: #{tpu_custom_call.1} parent=23 // pred_check_branch
          %178 = sbr.rel (%p176) target = $region28
        $region27: #{tpu_custom_call.1} parent=23 // pred_region
          %p179 = scmp.lt.s32.totalorder %s20, 1
          %s180 = scalar_select %p179, %s20, 1
          %p181 = scmp.lt.s32.totalorder %s21, 0
          %s182 = scalar_select %p181, %s21, 0
          %s183 = sadd.s32 %s182, %s180
          %s184 = smul.addr %s183, 8
          %s185 = scalar_lea.vmem %s0, %s184
        $region28: #{tpu_custom_call.1} parent=23 // pred_fallthru
          _
        // Predicated region
        $region29: #{tpu_custom_call.1} parent=23 // pred_check
          %p186 = pneg %p75
        $region30: #{tpu_custom_call.1} parent=23 // pred_check_branch
          %188 = sbr.rel (%p186) target = $region32
        $region31: #{tpu_custom_call.1} parent=23 // pred_region
          %p189 = scmp.lt.s32.totalorder %s20, 1
          %s190 = scalar_select %p189, %s20, 1
          %p191 = scmp.lt.s32.totalorder %s21, 0
          %s192 = scalar_select %p191, %s21, 0
          %s193 = sadd.s32 %s192, %s190
          %s194 = smul.addr %s193, 2
          %s195 = scalar_lea.vmem %s1, %s194
        $region32: #{tpu_custom_call.1} parent=23 // pred_fallthru
          _
      $region24: #{tpu_custom_call.1} parent=5 // pred_fallthru
        _
      %p196 = scmp.le.s32.totalorder 1, %s13
      %p197 = scmp.lt.s32.totalorder %s13, 3
      %p198 = pnand %p196, %p197
      %p199 = pneg %p198
      // Predicated region
      $region33: #{tpu_custom_call.1} parent=5 // pred_check
        _
      $region34: #{tpu_custom_call.1} parent=5 // pred_check_branch
        %201 = sbr.rel (%p198) target = $region36
      $region35: #{tpu_custom_call.1} parent=5 // pred_region
        %s202 = ssub.s32 %s13, 1
        %p203 = scmp.lt.s32.totalorder %s22, 1
        %s204 = scalar_select %p203, %s22, 1
        %p205 = scmp.lt.s32.totalorder %s23, 0
        %s206 = scalar_select %p205, %s23, 0
        %s207 = sadd.s32 %s206, %s204
        %s208 = smul.addr %s207, 8
        %s209 = scalar_lea.vmem %s0, %s208
        %p210 = pneg %p53
        %p211 = pneg %p50
        %p212 = scmp.lt.s32.totalorder %s22, 1
        %s213 = scalar_select %p212, %s22, 1
        %p214 = scmp.lt.s32.totalorder %s23, 0
        %s215 = scalar_select %p214, %s23, 0
        %s216 = sadd.s32 %s215, %s213
        %s217 = smul.addr %s216, 2
        %s218 = scalar_lea.vmem %s1, %s217
        %p219 = pneg %p81
        %p220 = pneg %p78
        %p221 = pneg %p102
        %p222 = pneg %p99
        %p223 = pneg %p123
        %p224 = pneg %p120
        %p225 = pneg %p151
        %p226 = pneg %p148
        %s227 = sand.u32 %s138, 1
        %s228 = scalar_lea.sflag [#allocation3], %s227
        %s229 = sand.u32 %s138, 1
        %s230 = smul.addr %s229, 8
        %s231 = scalar_lea.vmem [#allocation2], %s230
        %p232 = scmp.lt.s32.totalorder %s22, 1
        %s233 = scalar_select %p232, %s22, 1
        %p234 = scmp.lt.s32.totalorder %s23, 0
        %s235 = scalar_select %p234, %s23, 0
        %s236 = sadd.s32 %s235, %s233
        %s237 = smul.addr %s236, 8
        %s238 = scalar_lea.vmem %s0, %s237
        %p239 = scmp.lt.s32.totalorder %s22, 1
        %s240 = scalar_select %p239, %s22, 1
        %p241 = scmp.lt.s32.totalorder %s23, 0
        %s242 = scalar_select %p241, %s23, 0
        %s243 = sadd.s32 %s242, %s240
        %s244 = smul.addr %s243, 2
        %s245 = scalar_lea.vmem %s1, %s244
        %v246 = vld [vmem:[%s238] sm:$0xff]
        %v247 = vld [vmem:[%s245] sm:$0x1]
        %v248 = vld [vmem:[%s245 + $0x1] sm:$0x1]
        %s249 = smul.u32 %s23, 8
        %s250 = ssub.s32 8, %s249
        %p251 = scmp.lt.s32.totalorder %s250, 8
        %s252 = scalar_select %p251, %s250, 8
        %v253 = vlaneseq
        %v254 = vshrl.u32 %v253, 7
        %vm255 = vcmp.eq.s32.totalorder %v254, 0
        %v256 = vrot.slane %v246, 7
        %v257 = vlaneseq
        %v258 = vshrl.u32 %v257, 7
        %v259 = vsub.s32 0, %v258
        %v260 = vrot.slane %v247, %v259
        %v261 = vsel %vm255, %v260, %v256
        %s262 = ssub.s32 %s252, 1
        %v263 = vstv %s262
        %vm264 = vcmp.eq.s32.totalorder %v254, %v263
        %v265 = vrot.slane %v246, 1
        %v266 = vlaneseq
        %v267 = vshrl.u32 %v266, 7
        %v268 = vsub.s32 0, %v267
        %v269 = vrot.slane %v248, %v268
        %v270 = vsel %vm264, %v269, %v265
        %v271 = vld [vmem:[%s2] sm:$0xf]
        %s272 = scalar_lea.vmem %s2, 4
        %v273 = vld [vmem:[%s272] sm:$0xf]
        %vm274 = vcmask 31744
        %v276 = vsel %vm274, %v246, 0
        %vm278 = vcmask 1043456
        %v280 = vsel %vm278, %v273, 0
        %282 = vmatprep.subr.mxu0 0.0
        %283 = vmatpush1.msra.mxu0 %v280
        %284 = vmatprep.subr.mxu0 0.0
        %285 = vmatpush1.msra.mxu0 0.0
        %286 = vmatprep.subr.mxu0 0.0
        %287 = vmatpush1.msra.mxu0 0.0
        %288 = vmatprep.subr.mxu0 0.0
        %289 = vmatpush1.msra.mxu0 0.0
        %290 = vmatprep.subr.mxu0 0.0
        %291 = vmatpush1.msra.mxu0 0.0
        %292 = vmatprep.subr.mxu0 0.0
        %293 = vmatpush1.msra.mxu0 0.0
        %294 = vmatprep.subr.mxu0 0.0
        %295 = vmatpush1.msra.mxu0 0.0
        %296 = vmatprep.subr.mxu0 0.0
        %297 = vmatpush1.msra.mxu0 0.0
        %298 = vmatprep.subr.mxu0 0.0
        %299 = vmatpush1.msra.mxu0 0.0
        %300 = vmatprep.subr.mxu0 0.0
        %301 = vmatpush1.msra.mxu0 0.0
        %302 = vmatprep.subr.mxu0 0.0
        %303 = vmatpush1.msra.mxu0 0.0
        %304 = vmatprep.subr.mxu0 0.0
        %305 = vmatpush1.msra.mxu0 0.0
        %306 = vmatprep.subr.mxu0 0.0
        %307 = vmatpush1.msra.mxu0 0.0
        %308 = vmatprep.subr.mxu0 0.0
        %309 = vmatpush1.msra.mxu0 0.0
        %310 = vmatprep.subr.mxu0 0.0
        %311 = vmatpush1.msra.mxu0 0.0
        %312 = vmatprep.subr.mxu0 0.0
        %313 = vmatpush1.msra.mxu0 0.0
        %314 = vmatprep.subr.mxu0 0.0
        %315 = vmatpush1.msra.mxu0 0.0
        %316 = vmatprep.subr.mxu0 0.0
        %317 = vmatpush1.msra.mxu0 0.0
        %318 = vmatprep.subr.mxu0 0.0
        %319 = vmatpush1.msra.mxu0 0.0
        %320 = vmatprep.subr.mxu0 0.0
        %321 = vmatpush1.msra.mxu0 0.0
        %322 = vmatprep.subr.mxu0 0.0
        %323 = vmatpush1.msra.mxu0 0.0
        %324 = vmatprep.subr.mxu0 0.0
        %325 = vmatpush1.msra.mxu0 0.0
        %326 = vmatprep.subr.mxu0 0.0
        %327 = vmatpush1.msra.mxu0 0.0
        %328 = vmatprep.subr.mxu0 0.0
        %329 = vmatpush1.msra.mxu0 0.0
        %330 = vmatprep.subr.mxu0 0.0
        %331 = vmatpush1.msra.mxu0 0.0
        %332 = vmatprep.subr.mxu0 0.0
        %333 = vmatpush1.msra.mxu0 0.0
        %334 = vmatprep.subr.mxu0 0.0
        %335 = vmatpush1.msra.mxu0 0.0
        %336 = vmatprep.subr.mxu0 0.0
        %337 = vmatpush1.msra.mxu0 0.0
        %338 = vmatprep.subr.mxu0 0.0
        %339 = vmatpush1.msra.mxu0 0.0
        %340 = vmatprep.subr.mxu0 0.0
        %341 = vmatpush1.msra.mxu0 0.0
        %342 = vmatprep.subr.mxu0 0.0
        %343 = vmatpush1.msra.mxu0 0.0
        %344 = vmatprep.subr.mxu0 0.0
        %345 = vmatpush1.msra.mxu0 0.0
        %346 = vmatprep.mubr.f32.mxu0 0.0
        %347 = vmatmul.mubr.f32.gmra.mrb[0].mxu0 %v276
        %v348 = vpop.f32.mrb[0].mxu0
        %v349 = vadd.f32 0.0, %v348
        %v350 = vpop.f32.mrb[0].mxu0
        %351 = vdwg.mxu0
        %v353 = vsel %vm274, %v261, 0
        %v356 = vsel %vm278, %v271, 0
        %358 = vmatprep.subr.mxu0 0.0
        %359 = vmatpush1.msra.mxu0 %v356
        %360 = vmatprep.subr.mxu0 0.0
        %361 = vmatpush1.msra.mxu0 0.0
        %362 = vmatprep.subr.mxu0 0.0
        %363 = vmatpush1.msra.mxu0 0.0
        %364 = vmatprep.subr.mxu0 0.0
        %365 = vmatpush1.msra.mxu0 0.0
        %366 = vmatprep.subr.mxu0 0.0
        %367 = vmatpush1.msra.mxu0 0.0
        %368 = vmatprep.subr.mxu0 0.0
        %369 = vmatpush1.msra.mxu0 0.0
        %370 = vmatprep.subr.mxu0 0.0
        %371 = vmatpush1.msra.mxu0 0.0
        %372 = vmatprep.subr.mxu0 0.0
        %373 = vmatpush1.msra.mxu0 0.0
        %374 = vmatprep.subr.mxu0 0.0
        %375 = vmatpush1.msra.mxu0 0.0
        %376 = vmatprep.subr.mxu0 0.0
        %377 = vmatpush1.msra.mxu0 0.0
        %378 = vmatprep.subr.mxu0 0.0
        %379 = vmatpush1.msra.mxu0 0.0
        %380 = vmatprep.subr.mxu0 0.0
        %381 = vmatpush1.msra.mxu0 0.0
        %382 = vmatprep.subr.mxu0 0.0
        %383 = vmatpush1.msra.mxu0 0.0
        %384 = vmatprep.subr.mxu0 0.0
        %385 = vmatpush1.msra.mxu0 0.0
        %386 = vmatprep.subr.mxu0 0.0
        %387 = vmatpush1.msra.mxu0 0.0
        %388 = vmatprep.subr.mxu0 0.0
        %389 = vmatpush1.msra.mxu0 0.0
        %390 = vmatprep.subr.mxu0 0.0
        %391 = vmatpush1.msra.mxu0 0.0
        %392 = vmatprep.subr.mxu0 0.0
        %393 = vmatpush1.msra.mxu0 0.0
        %394 = vmatprep.subr.mxu0 0.0
        %395 = vmatpush1.msra.mxu0 0.0
        %396 = vmatprep.subr.mxu0 0.0
        %397 = vmatpush1.msra.mxu0 0.0
        %398 = vmatprep.subr.mxu0 0.0
        %399 = vmatpush1.msra.mxu0 0.0
        %400 = vmatprep.subr.mxu0 0.0
        %401 = vmatpush1.msra.mxu0 0.0
        %402 = vmatprep.subr.mxu0 0.0
        %403 = vmatpush1.msra.mxu0 0.0
        %404 = vmatprep.subr.mxu0 0.0
        %405 = vmatpush1.msra.mxu0 0.0
        %406 = vmatprep.subr.mxu0 0.0
        %407 = vmatpush1.msra.mxu0 0.0
        %408 = vmatprep.subr.mxu0 0.0
        %409 = vmatpush1.msra.mxu0 0.0
        %410 = vmatprep.subr.mxu0 0.0
        %411 = vmatpush1.msra.mxu0 0.0
        %412 = vmatprep.subr.mxu0 0.0
        %413 = vmatpush1.msra.mxu0 0.0
        %414 = vmatprep.subr.mxu0 0.0
        %415 = vmatpush1.msra.mxu0 0.0
        %416 = vmatprep.subr.mxu0 0.0
        %417 = vmatpush1.msra.mxu0 0.0
        %418 = vmatprep.subr.mxu0 0.0
        %419 = vmatpush1.msra.mxu0 0.0
        %420 = vmatprep.subr.mxu0 0.0
        %421 = vmatpush1.msra.mxu0 0.0
        %422 = vmatprep.mubr.f32.mxu0 0.0
        %423 = vmatmul.mubr.f32.gmra.mrb[0].mxu0 %v353
        %v424 = vpop.f32.mrb[0].mxu0
        %v425 = vadd.f32 %v349, %v424
        %v426 = vpop.f32.mrb[0].mxu0
        %427 = vdwg.mxu0
        %s428 = scalar_lea.vmem %s2, 8
        %v429 = vld [vmem:[%s428] sm:$0xf]
        %v431 = vsel %vm274, %v270, 0
        %v434 = vsel %vm278, %v429, 0
        %436 = vmatprep.subr.mxu0 0.0
        %437 = vmatpush1.msra.mxu0 %v434
        %438 = vmatprep.subr.mxu0 0.0
        %439 = vmatpush1.msra.mxu0 0.0
        %440 = vmatprep.subr.mxu0 0.0
        %441 = vmatpush1.msra.mxu0 0.0
        %442 = vmatprep.subr.mxu0 0.0
        %443 = vmatpush1.msra.mxu0 0.0
        %444 = vmatprep.subr.mxu0 0.0
        %445 = vmatpush1.msra.mxu0 0.0
        %446 = vmatprep.subr.mxu0 0.0
        %447 = vmatpush1.msra.mxu0 0.0
        %448 = vmatprep.subr.mxu0 0.0
        %449 = vmatpush1.msra.mxu0 0.0
        %450 = vmatprep.subr.mxu0 0.0
        %451 = vmatpush1.msra.mxu0 0.0
        %452 = vmatprep.subr.mxu0 0.0
        %453 = vmatpush1.msra.mxu0 0.0
        %454 = vmatprep.subr.mxu0 0.0
        %455 = vmatpush1.msra.mxu0 0.0
        %456 = vmatprep.subr.mxu0 0.0
        %457 = vmatpush1.msra.mxu0 0.0
        %458 = vmatprep.subr.mxu0 0.0
        %459 = vmatpush1.msra.mxu0 0.0
        %460 = vmatprep.subr.mxu0 0.0
        %461 = vmatpush1.msra.mxu0 0.0
        %462 = vmatprep.subr.mxu0 0.0
        %463 = vmatpush1.msra.mxu0 0.0
        %464 = vmatprep.subr.mxu0 0.0
        %465 = vmatpush1.msra.mxu0 0.0
        %466 = vmatprep.subr.mxu0 0.0
        %467 = vmatpush1.msra.mxu0 0.0
        %468 = vmatprep.subr.mxu0 0.0
        %469 = vmatpush1.msra.mxu0 0.0
        %470 = vmatprep.subr.mxu0 0.0
        %471 = vmatpush1.msra.mxu0 0.0
        %472 = vmatprep.subr.mxu0 0.0
        %473 = vmatpush1.msra.mxu0 0.0
        %474 = vmatprep.subr.mxu0 0.0
        %475 = vmatpush1.msra.mxu0 0.0
        %476 = vmatprep.subr.mxu0 0.0
        %477 = vmatpush1.msra.mxu0 0.0
        %478 = vmatprep.subr.mxu0 0.0
        %479 = vmatpush1.msra.mxu0 0.0
        %480 = vmatprep.subr.mxu0 0.0
        %481 = vmatpush1.msra.mxu0 0.0
        %482 = vmatprep.subr.mxu0 0.0
        %483 = vmatpush1.msra.mxu0 0.0
        %484 = vmatprep.subr.mxu0 0.0
        %485 = vmatpush1.msra.mxu0 0.0
        %486 = vmatprep.subr.mxu0 0.0
        %487 = vmatpush1.msra.mxu0 0.0
        %488 = vmatprep.subr.mxu0 0.0
        %489 = vmatpush1.msra.mxu0 0.0
        %490 = vmatprep.subr.mxu0 0.0
        %491 = vmatpush1.msra.mxu0 0.0
        %492 = vmatprep.subr.mxu0 0.0
        %493 = vmatpush1.msra.mxu0 0.0
        %494 = vmatprep.subr.mxu0 0.0
        %495 = vmatpush1.msra.mxu0 0.0
        %496 = vmatprep.subr.mxu0 0.0
        %497 = vmatpush1.msra.mxu0 0.0
        %498 = vmatprep.subr.mxu0 0.0
        %499 = vmatpush1.msra.mxu0 0.0
        %500 = vmatprep.mubr.f32.mxu0 0.0
        %501 = vmatmul.mubr.f32.gmra.mrb[0].mxu0 %v431
        %v502 = vpop.f32.mrb[0].mxu0
        %v503 = vadd.f32 0.0, %v502
        %v504 = vpop.f32.mrb[0].mxu0
        %505 = vdwg.mxu0
        %v506 = vadd.f32 %v425, %v503
        %v507 = vld [vmem:[%s3] sm:$0x1]
        %v509 = vlaneseq
        %v510 = vshrl.u32 %v509, 7
        %v511 = vsub.s32 0, %v510
        %v512 = vrot.slane %v507, %v511
        %v514 = vadd.f32 %v506, %v512
        %vm515 = vcmask 261120
        %516 = vst.msk [vmem:[%s231] sm:$0xff] %vm515, %v514
        %s517 = sand.u32 %s138, 1
        %s518 = scalar_lea.sflag [#allocation3], %s517
        %s519 = sand.u32 %s138, 1
        %s520 = smul.addr %s519, 8
        %s521 = scalar_lea.vmem [#allocation2], %s520
        // Predicated region
        $region37: #{tpu_custom_call.1} parent=35 // pred_check
          %p522 = pneg %p148
        $region38: #{tpu_custom_call.1} parent=35 // pred_check_branch
          %524 = sbr.rel (%p522) target = $region40
        $region39: #{tpu_custom_call.1} parent=35 // pred_region
          %s526 = ssub.s32 128, 128
          %527 = vsyncadd %s518, %s526
          %s528 = sadd.s32 %s23, %s22
          %s529 = smul.addr %s528, 128
          %s530 = scalar_lea.hbm %s4, %s529
          %s532 = sshll.u32 %s521, 4
          %s533 = int_to_ptr.vmem [resolvable:$true] %s532
          %535 = dma.vmem_to_hbm [thread:$0]  %s533, 128, %s530, %s518
        $region40: #{tpu_custom_call.1} parent=35 // pred_fallthru
          _
      $region36: #{tpu_custom_call.1} parent=5 // pred_fallthru
        _
      %p536 = scmp.le.s32.totalorder 2, %s13
      // Predicated region
      $region41: #{tpu_custom_call.1} parent=5 // pred_check
        %p537 = pneg %p536
      $region42: #{tpu_custom_call.1} parent=5 // pred_check_branch
        %539 = sbr.rel (%p537) target = $region44
      $region43: #{tpu_custom_call.1} parent=5 // pred_region
        %s540 = ssub.s32 %s13, 2
        // Predicated region
        $region45: #{tpu_custom_call.1} parent=43 // pred_check
          %p541 = pneg %p154
        $region46: #{tpu_custom_call.1} parent=43 // pred_check_branch
          %543 = sbr.rel (%p541) target = $region48
        $region47: #{tpu_custom_call.1} parent=43 // pred_region
          %s544 = sand.u32 %s139, 1
          %s545 = scalar_lea.sflag [#allocation3], %s544
          %s546 = sand.u32 %s139, 1
          %s547 = smul.addr %s546, 8
          %s548 = scalar_lea.vmem [#allocation2], %s547
          %549 = dma.done %s545, 128
        $region48: #{tpu_custom_call.1} parent=43 // pred_fallthru
          _
      $region44: #{tpu_custom_call.1} parent=5 // pred_fallthru
        _
    $region6: #{tpu_custom_call.1} parent=1 // loop_footer
      %s17 = sadd.s32 1, %s13
    $region7: #{tpu_custom_call.1} parent=1 // loop_footer_branch
      %12 = sbr.rel target = $region3
    $region8: #{tpu_custom_call.1} parent=1 // loop_exit
      _
    %550 = vsyncpa [#allocation3], 1
    %s551 = scalar_lea.sflag [#allocation3], 1
    %552 = vsyncpa %s551, 1

</llo_original>
